<compile_context>
chip_gen: v7x
topology: tpu7x:2x2x1
jax: 0.10.0
libtpu: 0.0.40
codegen_flags: <defaults>
</compile_context>

<pallas_src>
import jax
import jax.numpy as jnp
from jax.experimental import pallas as pl

# Set to jnp.bfloat16 to halve HBM traffic of the dominant enc stream; kept f32 so the
# results match the float32 PyTorch module within the 1e-5 check below.
MATMUL_DTYPE = jnp.float32


# ----------------------------- kernel ----------------------------------------

def _attention_kernel(h_t_ref, enc_ref, w_h_ref, w_e_ref, b_ref, v_ref, out_ref):
    """Fused attention scores + per-batch softmax for the whole batch (no grid).

    Shapes seen by the kernel:
      h_t_ref : [D, B]     decoder hidden states, one column per batch element
      enc_ref : [E, B*S]   encoder outputs, lane-dense over all (b, s) columns
      w_h_ref : [D, D]     hidden part of the attention weight  (W_att[:, :D])
      w_e_ref : [D, E]     encoder part of the attention weight (W_att[:, D:])
      b_ref   : [D, 1]     attention bias (column)
      v_ref   : [D, 1]     v weight (column)
      out_ref : [B, S]     row b = softmax over the sequence for batch element b
    """
    B, S = out_ref.shape
    D = w_h_ref.shape[0]

    # Hidden projection for ALL batch elements in one MXU matmul; bias folded in.
    h_proj = jnp.dot(w_h_ref[...], h_t_ref[...],
                     preferred_element_type=jnp.float32) + b_ref[...]           # [D, B]

    # Encoder projection: ONE lane-dense MXU matmul with N = B*S.
    e_proj = jnp.dot(w_e_ref[...], enc_ref[...],
                     preferred_element_type=jnp.float32)                        # [D, B*S]

    # Lane-segmented broadcast of each batch's hidden projection to its S columns.
    h_bcast = jnp.concatenate(
        [jnp.broadcast_to(h_proj[:, b:b + 1], (D, S)) for b in range(B)],
        axis=1)                                                                 # [D, B*S]

    a = jnp.tanh(e_proj + h_bcast)                                              # [D, B*S]

    # v-projection: VPU multiply + a single sublane reduction over D.
    scores = jnp.sum(a * v_ref[...], axis=0, keepdims=True)                     # [1, B*S]

    # Per-batch softmax over the sequence (lane) segment; B is a static trace-time
    # constant so this unrolls into a handful of tiny lane reductions.
    rows = []
    for b in range(B):
        s_b = scores[:, b * S:(b + 1) * S]                                      # [1, S]
        m_b = jnp.max(s_b, axis=1, keepdims=True)
        e_b = jnp.exp(s_b - m_b)
        d_b = jnp.sum(e_b, axis=1, keepdims=True)
        rows.append(e_b * pl.reciprocal(d_b, approx=False))
    out_ref[...] = jnp.concatenate(rows, axis=0)                                # one [B,S] store


# ----------------------------- wrapper ---------------------------------------

@jax.jit
def attention_forward(hidden, enc_out, w_att, b_att, v_w):
    """hidden [B,D], enc_out [S,B,E], w_att [D,D+E], b_att [D], v_w [1,D]
       -> attention weights [S, B] (softmax over dim 0), matching the PyTorch module."""
    S, B, E = enc_out.shape
    Bh, D = hidden.shape
    assert Bh == B
    assert w_att.shape == (D, D + E)

    # Parameter prep (done once at init in a real model).
    w_h = w_att[:, :D]                                  # [D, D] — acts on the hidden half
    w_e = w_att[:, D:].astype(MATMUL_DTYPE)             # [D, E] — acts on the encoder half
    b_col = b_att.reshape(D, 1)
    v_col = v_w.reshape(D, 1)

    # Layout plumbing (tiny, wrapper-side): hidden as columns, enc flattened so the lane
    # axis carries all (b, s) columns, sequence fastest within each batch segment.
    h_t = hidden.T                                                       # [D, B]
    enc_flat = jnp.transpose(enc_out, (2, 1, 0)).reshape(E, B * S)       # [E, B*S]
    enc_flat = enc_flat.astype(MATMUL_DTYPE)

    # Single fused invocation: the whole problem fits comfortably in VMEM, so no grid,
    # no per-step overhead, and every array is a single whole-array VMEM block.
    out = pl.pallas_call(
        _attention_kernel,
        out_shape=jax.ShapeDtypeStruct((B, S), jnp.float32),
    )(h_t, enc_flat, w_h, w_e, b_col, v_col)

    # [B, S] -> [S, B] to match the PyTorch module's output layout (tiny).
    return out.T


# Pure-JAX reference mirroring the PyTorch forward.
def _reference(hidden, enc_out, w_att, b_att, v_w):
    S, B, E = enc_out.shape
    D = hidden.shape[1]
    hidden_rep = jnp.broadcast_to(hidden[None, :, :], (S, B, D))
    cat = jnp.concatenate([hidden_rep, enc_out], axis=2)          # [S, B, D+E]
    a = jnp.tanh(cat @ w_att.T + b_att)                           # [S, B, D]
    scores = (a @ v_w.T)[..., 0]                                  # [S, B]
    return jax.nn.softmax(scores, axis=0)


if __name__ == "__main__":
    # Small shapes consistent with the module's forward.
    dec_hid_dim = 32     # D
    enc_output_dim = 32  # E
    batch = 2            # B
    src_len = 8          # S

    key = jax.random.PRNGKey(0)
    k_h, k_e, k_w, k_b, k_v = jax.random.split(key, 5)

    hidden = jax.random.normal(k_h, (batch, dec_hid_dim), dtype=jnp.float32)
    enc_out = jax.random.normal(k_e, (src_len, batch, enc_output_dim), dtype=jnp.float32)

    # Deterministic parameter init mimicking nn.Linear's U(-1/sqrt(fan_in), +1/sqrt(fan_in)).
    fan_in_att = enc_output_dim + dec_hid_dim
    lim_att = 1.0 / jnp.sqrt(jnp.float32(fan_in_att))
    w_att = jax.random.uniform(k_w, (dec_hid_dim, fan_in_att),
                               minval=-lim_att, maxval=lim_att, dtype=jnp.float32)
    b_att = jax.random.uniform(k_b, (dec_hid_dim,),
                               minval=-lim_att, maxval=lim_att, dtype=jnp.float32)
    lim_v = 1.0 / jnp.sqrt(jnp.float32(dec_hid_dim))
    v_w = jax.random.uniform(k_v, (1, dec_hid_dim),
                             minval=-lim_v, maxval=lim_v, dtype=jnp.float32)

    out = attention_forward(hidden, enc_out, w_att, b_att, v_w)
    out = jax.block_until_ready(out)

    ref = _reference(hidden, enc_out, w_att, b_att, v_w)
    assert out.shape == (src_len, batch)
    assert jnp.allclose(out, ref, atol=1e-5, rtol=1e-5), "mismatch vs reference"
    assert jnp.allclose(jnp.sum(out, axis=0), 1.0, atol=1e-5), "softmax over dim 0 must sum to 1"

    print("KERNEL_OK")
</pallas_src>

<mosaic_0001>
module attributes {stable_mosaic.version = 11 : i64} {
  func.func @_attention_kernel(%arg0: memref<32x2xf32, #tpu.memory_space<vmem>>, %arg1: memref<32x16xf32, #tpu.memory_space<vmem>>, %arg2: memref<32x32xf32, #tpu.memory_space<vmem>>, %arg3: memref<32x32xf32, #tpu.memory_space<vmem>>, %arg4: memref<32x1xf32, #tpu.memory_space<vmem>>, %arg5: memref<32x1xf32, #tpu.memory_space<vmem>>, %arg6: memref<2x8xf32, #tpu.memory_space<vmem>>) attributes {dimension_semantics = [], scalar_prefetch = 0 : i64, scratch_operands = 0 : i64, tpu.core_type = #tpu.core_type<tc>} {
    %c0 = arith.constant 0 : index
    %c0_0 = arith.constant 0 : index
    %0 = vector.load %arg2[%c0, %c0_0] : memref<32x32xf32, #tpu.memory_space<vmem>>, vector<32x32xf32>
    %c0_1 = arith.constant 0 : index
    %c0_2 = arith.constant 0 : index
    %1 = vector.load %arg0[%c0_1, %c0_2] : memref<32x2xf32, #tpu.memory_space<vmem>>, vector<32x2xf32>
    %cst = arith.constant dense<0.000000e+00> : vector<32x2xf32>
    %2 = tpu.matmul %0, %1, %cst {dimension_numbers = #tpu.dot_dimension_numbers<[1], [0], [0], [1], [0, 0, 1, 1], [], []>} : vector<32x32xf32>, vector<32x2xf32>, vector<32x2xf32> -> vector<32x2xf32>
    %c0_3 = arith.constant 0 : index
    %c0_4 = arith.constant 0 : index
    %3 = vector.load %arg4[%c0_3, %c0_4] : memref<32x1xf32, #tpu.memory_space<vmem>>, vector<32x1xf32>
    %4 = vector.broadcast %3 : vector<32x1xf32> to vector<32x2xf32>
    %5 = arith.addf %2, %4 : vector<32x2xf32>
    %c0_5 = arith.constant 0 : index
    %c0_6 = arith.constant 0 : index
    %6 = vector.load %arg3[%c0_5, %c0_6] : memref<32x32xf32, #tpu.memory_space<vmem>>, vector<32x32xf32>
    %c0_7 = arith.constant 0 : index
    %c0_8 = arith.constant 0 : index
    %7 = vector.load %arg1[%c0_7, %c0_8] : memref<32x16xf32, #tpu.memory_space<vmem>>, vector<32x16xf32>
    %cst_9 = arith.constant dense<0.000000e+00> : vector<32x16xf32>
    %8 = tpu.matmul %6, %7, %cst_9 {dimension_numbers = #tpu.dot_dimension_numbers<[1], [0], [0], [1], [0, 0, 1, 1], [], []>} : vector<32x32xf32>, vector<32x16xf32>, vector<32x16xf32> -> vector<32x16xf32>
    %9 = vector.extract_strided_slice %5 {offsets = [0, 0], sizes = [32, 1], strides = [1, 1]} : vector<32x2xf32> to vector<32x1xf32>
    %10 = vector.shape_cast %9 : vector<32x1xf32> to vector<32x1xf32>
    %11 = vector.broadcast %10 : vector<32x1xf32> to vector<32x8xf32>
    %12 = vector.extract_strided_slice %5 {offsets = [0, 1], sizes = [32, 1], strides = [1, 1]} : vector<32x2xf32> to vector<32x1xf32>
    %13 = vector.shape_cast %12 : vector<32x1xf32> to vector<32x1xf32>
    %14 = vector.broadcast %13 : vector<32x1xf32> to vector<32x8xf32>
    %15 = tpu.concatenate %11, %14 in 1 : vector<32x8xf32>, vector<32x8xf32> -> vector<32x16xf32>
    %16 = arith.addf %8, %15 : vector<32x16xf32>
    %17 = math.tanh %16 : vector<32x16xf32>
    %c0_10 = arith.constant 0 : index
    %c0_11 = arith.constant 0 : index
    %18 = vector.load %arg5[%c0_10, %c0_11] : memref<32x1xf32, #tpu.memory_space<vmem>>, vector<32x1xf32>
    %19 = vector.broadcast %18 : vector<32x1xf32> to vector<32x16xf32>
    %20 = arith.mulf %17, %19 : vector<32x16xf32>
    %cst_12 = arith.constant dense<0.000000e+00> : vector<16xf32>
    %21 = vector.multi_reduction <add>, %20, %cst_12 [0] : vector<32x16xf32> to vector<16xf32>
    %22 = vector.shape_cast %21 : vector<16xf32> to vector<1x16xf32>
    %23 = vector.extract_strided_slice %22 {offsets = [0, 0], sizes = [1, 8], strides = [1, 1]} : vector<1x16xf32> to vector<1x8xf32>
    %cst_13 = arith.constant dense<0xFF800000> : vector<1xf32>
    %24 = vector.multi_reduction <maximumf>, %23, %cst_13 [1] : vector<1x8xf32> to vector<1xf32>
    %25 = vector.shape_cast %24 : vector<1xf32> to vector<1x1xf32>
    %26 = vector.broadcast %25 : vector<1x1xf32> to vector<1x8xf32>
    %27 = arith.subf %23, %26 : vector<1x8xf32>
    %28 = math.exp %27 : vector<1x8xf32>
    %cst_14 = arith.constant dense<0.000000e+00> : vector<1xf32>
    %29 = vector.multi_reduction <add>, %28, %cst_14 [1] : vector<1x8xf32> to vector<1xf32>
    %30 = vector.shape_cast %29 : vector<1xf32> to vector<1x1xf32>
    %31 = tpu.reciprocal %30 : vector<1x1xf32> -> vector<1x1xf32>
    %32 = vector.broadcast %31 : vector<1x1xf32> to vector<1x8xf32>
    %33 = arith.mulf %28, %32 : vector<1x8xf32>
    %34 = vector.extract_strided_slice %22 {offsets = [0, 8], sizes = [1, 8], strides = [1, 1]} : vector<1x16xf32> to vector<1x8xf32>
    %cst_15 = arith.constant dense<0xFF800000> : vector<1xf32>
    %35 = vector.multi_reduction <maximumf>, %34, %cst_15 [1] : vector<1x8xf32> to vector<1xf32>
    %36 = vector.shape_cast %35 : vector<1xf32> to vector<1x1xf32>
    %37 = vector.broadcast %36 : vector<1x1xf32> to vector<1x8xf32>
    %38 = arith.subf %34, %37 : vector<1x8xf32>
    %39 = math.exp %38 : vector<1x8xf32>
    %cst_16 = arith.constant dense<0.000000e+00> : vector<1xf32>
    %40 = vector.multi_reduction <add>, %39, %cst_16 [1] : vector<1x8xf32> to vector<1xf32>
    %41 = vector.shape_cast %40 : vector<1xf32> to vector<1x1xf32>
    %42 = tpu.reciprocal %41 : vector<1x1xf32> -> vector<1x1xf32>
    %43 = vector.broadcast %42 : vector<1x1xf32> to vector<1x8xf32>
    %44 = arith.mulf %39, %43 : vector<1x8xf32>
    %45 = tpu.concatenate %33, %44 in 0 : vector<1x8xf32>, vector<1x8xf32> -> vector<2x8xf32>
    %c0_17 = arith.constant 0 : index
    %c0_18 = arith.constant 0 : index
    %46 = vector.load %arg6[%c0_17, %c0_18] : memref<2x8xf32, #tpu.memory_space<vmem>>, vector<2x8xf32>
    tpu.vector_store %arg6[%c0_17, %c0_18], %45 {strides = array<i32>} : memref<2x8xf32, #tpu.memory_space<vmem>>, vector<2x8xf32>,
    return
  }
}

</mosaic_0001>

<llo_original>
// kernel: attention_forward.1
$region0: #{attention_forward.1}
  #allocation0 [shape = 'u32[]', space=smem, size = 0x4, offset = 0x4, fixed_abs, tag = 'smem constant byte address 0x4 - core index']
  #allocation1 [shape = 'u32[144,128]{1,0:T(1,128)}', space=vmem, size = 0x12000, scoped, tag = 'internal scratch']
  %s0 = inlined_call_operand.vmem [shape: f32[32,2], index: 0, kind: input, shape index: {}]
  %s1 = inlined_call_operand.vmem [shape: f32[32,16], index: 1, kind: input, shape index: {}]
  %s2 = inlined_call_operand.vmem [shape: f32[32,32], index: 2, kind: input, shape index: {}]
  %s3 = inlined_call_operand.vmem [shape: f32[32,32], index: 3, kind: input, shape index: {}]
  %s4 = inlined_call_operand.vmem [shape: f32[32,1], index: 4, kind: input, shape index: {}]
  %s5 = inlined_call_operand.vmem [shape: f32[32,1], index: 5, kind: input, shape index: {}]
  %s6 = inlined_call_operand.hbm [shape: f32[2,8], index: 6, kind: output, shape index: {}]
  %s7 = sld [smem:[#allocation0]]
  $region34: #{attention_forward.1} parent=0
    _
  %s9 = ssub.s32 1, %s7
  %s10 = scalar_select 0, %s9, %s7
  $region1: #{attention_forward.1} parent=0
    #allocation2 [shape = 'u8[1024]{0}', space=vmem, size = 0x400, scoped, tag = 'output window, operand 0, single buffered']
    #allocation3 [shape = 's32[1]{0}', space=sflag, size = 0x4, scoped, tag = 'scoped memory for attention_forward.1']
    %11 = vsyncpa [#allocation3], 0
    // Predicated region
    $region2: #{attention_forward.1} parent=1 // pred_check
      _
    $region3: #{attention_forward.1} parent=1 // pred_check_branch
      %13 = sbr.rel (0) target = $region5
    $region4: #{attention_forward.1} parent=1 // pred_region
      _
    $region5: #{attention_forward.1} parent=1 // pred_fallthru
      _
    // Predicated region
    $region6: #{attention_forward.1} parent=1 // pred_check
      _
    $region7: #{attention_forward.1} parent=1 // pred_check_branch
      %15 = sbr.rel (0) target = $region9
    $region8: #{attention_forward.1} parent=1 // pred_region
      _
    $region9: #{attention_forward.1} parent=1 // pred_fallthru
      _
    // Predicated region
    $region10: #{attention_forward.1} parent=1 // pred_check
      _
    $region11: #{attention_forward.1} parent=1 // pred_check_branch
      %17 = sbr.rel (0) target = $region13
    $region12: #{attention_forward.1} parent=1 // pred_region
      _
    $region13: #{attention_forward.1} parent=1 // pred_fallthru
      _
    // Predicated region
    $region14: #{attention_forward.1} parent=1 // pred_check
      _
    $region15: #{attention_forward.1} parent=1 // pred_check_branch
      %19 = sbr.rel (0) target = $region17
    $region16: #{attention_forward.1} parent=1 // pred_region
      _
    $region17: #{attention_forward.1} parent=1 // pred_fallthru
      _
    // Predicated region
    $region18: #{attention_forward.1} parent=1 // pred_check
      _
    $region19: #{attention_forward.1} parent=1 // pred_check_branch
      %21 = sbr.rel (0) target = $region21
    $region20: #{attention_forward.1} parent=1 // pred_region
      _
    $region21: #{attention_forward.1} parent=1 // pred_fallthru
      _
    // Predicated region
    $region22: #{attention_forward.1} parent=1 // pred_check
      _
    $region23: #{attention_forward.1} parent=1 // pred_check_branch
      %23 = sbr.rel (0) target = $region25
    $region24: #{attention_forward.1} parent=1 // pred_region
      _
    $region25: #{attention_forward.1} parent=1 // pred_fallthru
      _
    %v24 = vld [vmem:[%s2] sm:$0xff]
    %v25 = vld [vmem:[%s2 + $0x8] sm:$0xff]
    %v26 = vld [vmem:[%s2 + $0x10] sm:$0xff]
    %v27 = vld [vmem:[%s2 + $0x18] sm:$0xff]
    %v28 = vld [vmem:[%s0] sm:$0xff]
    %v29 = vld [vmem:[%s0 + $0x8] sm:$0xff]
    %v30 = vld [vmem:[%s0 + $0x10] sm:$0xff]
    %v31 = vld [vmem:[%s0 + $0x18] sm:$0xff]
    %v32 = vld [vmem:[%s4] sm:$0xff]
    %v33 = vld [vmem:[%s4 + $0x8] sm:$0xff]
    %v34 = vld [vmem:[%s4 + $0x10] sm:$0xff]
    %v35 = vld [vmem:[%s4 + $0x18] sm:$0xff]
    %37 = vset.pattern.permute.xlu0 0
    %38 = vperm.xlu0 %37, %v32
    %v39 = vpop.permute.xlu0 %38
    %42 = vset.pattern.permute.xlu0 0
    %43 = vperm.xlu0 %42, %v33
    %v44 = vpop.permute.xlu0 %43
    %47 = vset.pattern.permute.xlu0 0
    %48 = vperm.xlu0 %47, %v34
    %v49 = vpop.permute.xlu0 %48
    %52 = vset.pattern.permute.xlu0 0
    %53 = vperm.xlu0 %52, %v35
    %v54 = vpop.permute.xlu0 %53
    %vm56 = vcmask 261120
    %v58 = vsel %vm56, %v24, 0
    %v61 = vsel %vm56, %v25, 0
    %v64 = vsel %vm56, %v26, 0
    %v67 = vsel %vm56, %v27, 0
    %69 = vmatprep.subr.mxu0 0.0
    %70 = vmatpush1.msra.mxu0 %v28
    %71 = vmatprep.subr.mxu0 0.0
    %72 = vmatpush1.msra.mxu0 %v29
    %73 = vmatprep.subr.mxu0 0.0
    %74 = vmatpush1.msra.mxu0 %v30
    %75 = vmatprep.subr.mxu0 0.0
    %76 = vmatpush1.msra.mxu0 %v31
    %77 = vmatprep.subr.mxu0 0.0
    %78 = vmatpush1.msra.mxu0 0.0
    %79 = vmatprep.subr.mxu0 0.0
    %80 = vmatpush1.msra.mxu0 0.0
    %81 = vmatprep.subr.mxu0 0.0
    %82 = vmatpush1.msra.mxu0 0.0
    %83 = vmatprep.subr.mxu0 0.0
    %84 = vmatpush1.msra.mxu0 0.0
    %85 = vmatprep.subr.mxu0 0.0
    %86 = vmatpush1.msra.mxu0 0.0
    %87 = vmatprep.subr.mxu0 0.0
    %88 = vmatpush1.msra.mxu0 0.0
    %89 = vmatprep.subr.mxu0 0.0
    %90 = vmatpush1.msra.mxu0 0.0
    %91 = vmatprep.subr.mxu0 0.0
    %92 = vmatpush1.msra.mxu0 0.0
    %93 = vmatprep.subr.mxu0 0.0
    %94 = vmatpush1.msra.mxu0 0.0
    %95 = vmatprep.subr.mxu0 0.0
    %96 = vmatpush1.msra.mxu0 0.0
    %97 = vmatprep.subr.mxu0 0.0
    %98 = vmatpush1.msra.mxu0 0.0
    %99 = vmatprep.subr.mxu0 0.0
    %100 = vmatpush1.msra.mxu0 0.0
    %101 = vmatprep.subr.mxu0 0.0
    %102 = vmatpush1.msra.mxu0 0.0
    %103 = vmatprep.subr.mxu0 0.0
    %104 = vmatpush1.msra.mxu0 0.0
    %105 = vmatprep.subr.mxu0 0.0
    %106 = vmatpush1.msra.mxu0 0.0
    %107 = vmatprep.subr.mxu0 0.0
    %108 = vmatpush1.msra.mxu0 0.0
    %109 = vmatprep.subr.mxu0 0.0
    %110 = vmatpush1.msra.mxu0 0.0
    %111 = vmatprep.subr.mxu0 0.0
    %112 = vmatpush1.msra.mxu0 0.0
    %113 = vmatprep.subr.mxu0 0.0
    %114 = vmatpush1.msra.mxu0 0.0
    %115 = vmatprep.subr.mxu0 0.0
    %116 = vmatpush1.msra.mxu0 0.0
    %117 = vmatprep.subr.mxu0 0.0
    %118 = vmatpush1.msra.mxu0 0.0
    %119 = vmatprep.subr.mxu0 0.0
    %120 = vmatpush1.msra.mxu0 0.0
    %121 = vmatprep.subr.mxu0 0.0
    %122 = vmatpush1.msra.mxu0 0.0
    %123 = vmatprep.subr.mxu0 0.0
    %124 = vmatpush1.msra.mxu0 0.0
    %125 = vmatprep.subr.mxu0 0.0
    %126 = vmatpush1.msra.mxu0 0.0
    %127 = vmatprep.subr.mxu0 0.0
    %128 = vmatpush1.msra.mxu0 0.0
    %129 = vmatprep.subr.mxu0 0.0
    %130 = vmatpush1.msra.mxu0 0.0
    %131 = vmatprep.subr.mxu0 0.0
    %132 = vmatpush1.msra.mxu0 0.0
    %133 = vmatprep.mubr.f32.mxu0 0.0
    %134 = vmatmul.mubr.f32.gmra.mrb[0].mxu0 %v58
    %v135 = vpop.f32.mrb[0].mxu0
    %v136 = vadd.f32 %v39, %v135
    %v137 = vpop.f32.mrb[0].mxu0
    %138 = vmatprep.mubr.f32.mxu0 0.0
    %139 = vmatmul.mubr.f32.gmra.mrb[0].mxu0 %v61
    %v140 = vpop.f32.mrb[0].mxu0
    %v141 = vadd.f32 %v44, %v140
    %v142 = vpop.f32.mrb[0].mxu0
    %143 = vmatprep.mubr.f32.mxu0 0.0
    %144 = vmatmul.mubr.f32.gmra.mrb[0].mxu0 %v64
    %v145 = vpop.f32.mrb[0].mxu0
    %v146 = vadd.f32 %v49, %v145
    %v147 = vpop.f32.mrb[0].mxu0
    %148 = vmatprep.mubr.f32.mxu0 0.0
    %149 = vmatmul.mubr.f32.gmra.mrb[0].mxu0 %v67
    %v150 = vpop.f32.mrb[0].mxu0
    %v151 = vadd.f32 %v54, %v150
    %v152 = vpop.f32.mrb[0].mxu0
    %153 = vdwg.mxu0
    %v154 = vld [vmem:[%s3] sm:$0xff]
    %v155 = vld [vmem:[%s3 + $0x8] sm:$0xff]
    %v156 = vld [vmem:[%s3 + $0x10] sm:$0xff]
    %v157 = vld [vmem:[%s3 + $0x18] sm:$0xff]
    %v158 = vld [vmem:[%s1] sm:$0xff]
    %v159 = vld [vmem:[%s1 + $0x8] sm:$0xff]
    %v160 = vld [vmem:[%s1 + $0x10] sm:$0xff]
    %v161 = vld [vmem:[%s1 + $0x18] sm:$0xff]
    %163 = vset.pattern.permute.xlu0 0
    %164 = vperm.xlu0 %163, %v136
    %v165 = vpop.permute.xlu0 %164
    %168 = vset.pattern.permute.xlu0 0
    %169 = vperm.xlu0 %168, %v141
    %v170 = vpop.permute.xlu0 %169
    %173 = vset.pattern.permute.xlu0 0
    %174 = vperm.xlu0 %173, %v146
    %v175 = vpop.permute.xlu0 %174
    %178 = vset.pattern.permute.xlu0 0
    %179 = vperm.xlu0 %178, %v151
    %v180 = vpop.permute.xlu0 %179
    %182 = vset.pattern.permute.xlu0 1
    %183 = vperm.xlu0 %182, %v136
    %v184 = vpop.permute.xlu0 %183
    %186 = vset.pattern.permute.xlu0 1
    %187 = vperm.xlu0 %186, %v141
    %v188 = vpop.permute.xlu0 %187
    %190 = vset.pattern.permute.xlu0 1
    %191 = vperm.xlu0 %190, %v146
    %v192 = vpop.permute.xlu0 %191
    %194 = vset.pattern.permute.xlu0 1
    %195 = vperm.xlu0 %194, %v151
    %v196 = vpop.permute.xlu0 %195
    %vm198 = vcmask 64512
    %v199 = vsel %vm198, %v165, %v184
    %v200 = vsel %vm198, %v170, %v188
    %v201 = vsel %vm198, %v175, %v192
    %v202 = vsel %vm198, %v180, %v196
    %v204 = vsel %vm56, %v154, 0
    %v207 = vsel %vm56, %v155, 0
    %v210 = vsel %vm56, %v156, 0
    %v213 = vsel %vm56, %v157, 0
    %215 = vmatprep.subr.mxu0 0.0
    %216 = vmatpush1.msra.mxu0 %v158
    %217 = vmatprep.subr.mxu0 0.0
    %218 = vmatpush1.msra.mxu0 %v159
    %219 = vmatprep.subr.mxu0 0.0
    %220 = vmatpush1.msra.mxu0 %v160
    %221 = vmatprep.subr.mxu0 0.0
    %222 = vmatpush1.msra.mxu0 %v161
    %223 = vmatprep.subr.mxu0 0.0
    %224 = vmatpush1.msra.mxu0 0.0
    %225 = vmatprep.subr.mxu0 0.0
    %226 = vmatpush1.msra.mxu0 0.0
    %227 = vmatprep.subr.mxu0 0.0
    %228 = vmatpush1.msra.mxu0 0.0
    %229 = vmatprep.subr.mxu0 0.0
    %230 = vmatpush1.msra.mxu0 0.0
    %231 = vmatprep.subr.mxu0 0.0
    %232 = vmatpush1.msra.mxu0 0.0
    %233 = vmatprep.subr.mxu0 0.0
    %234 = vmatpush1.msra.mxu0 0.0
    %235 = vmatprep.subr.mxu0 0.0
    %236 = vmatpush1.msra.mxu0 0.0
    %237 = vmatprep.subr.mxu0 0.0
    %238 = vmatpush1.msra.mxu0 0.0
    %239 = vmatprep.subr.mxu0 0.0
    %240 = vmatpush1.msra.mxu0 0.0
    %241 = vmatprep.subr.mxu0 0.0
    %242 = vmatpush1.msra.mxu0 0.0
    %243 = vmatprep.subr.mxu0 0.0
    %244 = vmatpush1.msra.mxu0 0.0
    %245 = vmatprep.subr.mxu0 0.0
    %246 = vmatpush1.msra.mxu0 0.0
    %247 = vmatprep.subr.mxu0 0.0
    %248 = vmatpush1.msra.mxu0 0.0
    %249 = vmatprep.subr.mxu0 0.0
    %250 = vmatpush1.msra.mxu0 0.0
    %251 = vmatprep.subr.mxu0 0.0
    %252 = vmatpush1.msra.mxu0 0.0
    %253 = vmatprep.subr.mxu0 0.0
    %254 = vmatpush1.msra.mxu0 0.0
    %255 = vmatprep.subr.mxu0 0.0
    %256 = vmatpush1.msra.mxu0 0.0
    %257 = vmatprep.subr.mxu0 0.0
    %258 = vmatpush1.msra.mxu0 0.0
    %259 = vmatprep.subr.mxu0 0.0
    %260 = vmatpush1.msra.mxu0 0.0
    %261 = vmatprep.subr.mxu0 0.0
    %262 = vmatpush1.msra.mxu0 0.0
    %263 = vmatprep.subr.mxu0 0.0
    %264 = vmatpush1.msra.mxu0 0.0
    %265 = vmatprep.subr.mxu0 0.0
    %266 = vmatpush1.msra.mxu0 0.0
    %267 = vmatprep.subr.mxu0 0.0
    %268 = vmatpush1.msra.mxu0 0.0
    %269 = vmatprep.subr.mxu0 0.0
    %270 = vmatpush1.msra.mxu0 0.0
    %271 = vmatprep.subr.mxu0 0.0
    %272 = vmatpush1.msra.mxu0 0.0
    %273 = vmatprep.subr.mxu0 0.0
    %274 = vmatpush1.msra.mxu0 0.0
    %275 = vmatprep.subr.mxu0 0.0
    %276 = vmatpush1.msra.mxu0 0.0
    %277 = vmatprep.subr.mxu0 0.0
    %278 = vmatpush1.msra.mxu0 0.0
    %279 = vmatprep.mubr.f32.mxu0 0.0
    %280 = vmatmul.mubr.f32.gmra.mrb[0].mxu0 %v204
    %v281 = vpop.f32.mrb[0].mxu0
    %v282 = vadd.f32 %v199, %v281
    %v283 = vpop.f32.mrb[0].mxu0
    %284 = vmatprep.mubr.f32.mxu0 0.0
    %285 = vmatmul.mubr.f32.gmra.mrb[0].mxu0 %v207
    %v286 = vpop.f32.mrb[0].mxu0
    %v287 = vadd.f32 %v200, %v286
    %v288 = vpop.f32.mrb[0].mxu0
    %289 = vmatprep.mubr.f32.mxu0 0.0
    %290 = vmatmul.mubr.f32.gmra.mrb[0].mxu0 %v210
    %v291 = vpop.f32.mrb[0].mxu0
    %v292 = vadd.f32 %v201, %v291
    %v293 = vpop.f32.mrb[0].mxu0
    %294 = vmatprep.mubr.f32.mxu0 0.0
    %295 = vmatmul.mubr.f32.gmra.mrb[0].mxu0 %v213
    %v296 = vpop.f32.mrb[0].mxu0
    %v297 = vadd.f32 %v202, %v296
    %v298 = vpop.f32.mrb[0].mxu0
    %299 = vdwg.mxu0
    %v300 = vtanh.pop %v282
    %v301 = vtanh.pop %v287
    %v302 = vtanh.pop %v292
    %v303 = vtanh.pop %v297
    %v304 = vld [vmem:[%s5] sm:$0xff]
    %v305 = vld [vmem:[%s5 + $0x8] sm:$0xff]
    %v306 = vld [vmem:[%s5 + $0x10] sm:$0xff]
    %v307 = vld [vmem:[%s5 + $0x18] sm:$0xff]
    %309 = vset.pattern.permute.xlu0 0
    %310 = vperm.xlu0 %309, %v304
    %v311 = vpop.permute.xlu0 %310
    %314 = vset.pattern.permute.xlu0 0
    %315 = vperm.xlu0 %314, %v305
    %v316 = vpop.permute.xlu0 %315
    %319 = vset.pattern.permute.xlu0 0
    %320 = vperm.xlu0 %319, %v306
    %v321 = vpop.permute.xlu0 %320
    %324 = vset.pattern.permute.xlu0 0
    %325 = vperm.xlu0 %324, %v307
    %v326 = vpop.permute.xlu0 %325
    %v328 = vmul.f32 %v300, %v311
    %v329 = vmul.f32 %v301, %v316
    %v330 = vmul.f32 %v302, %v321
    %v331 = vmul.f32 %v303, %v326
    %vm332 = vcmask 130048
    %v333 = vsel %vm332, %v328, 0.0
    %v334 = vsel %vm332, %v329, 0.0
    %v335 = vadd.f32 %v333, %v334
    %v336 = vsel %vm332, %v330, 0.0
    %v337 = vadd.f32 %v335, %v336
    %v338 = vsel %vm332, %v331, 0.0
    %v339 = vadd.f32 %v337, %v338
    %v340 = vrot.slane %v339, 4
    %v341 = vadd.f32 %v339, %v340
    %v342 = vrot.slane %v341, 2
    %v343 = vadd.f32 %v341, %v342
    %v344 = vrot.slane %v343, 1
    %v345 = vadd.f32 %v343, %v344
    %v346 = vsel %vm198, %v345, -inf
    %347 = vmax.xlane.f32.xlu0 %v346
    %v348 = vpop.xlane.xlu0 %347
    %v349 = vsub.f32 %v345, %v348
    %v350 = vmul.f32 %v349, 1.442695
    %v351 = vpow.pop %v350
    %v352 = vsel %vm198, %v351, 0.0
    %353 = vadd.xlane.f32.xlu0 %v352
    %v354 = vpop.xlane.xlu0 %353
    %v355 = vrcp.pop %v354
    %v356 = vmul.f32 %v351, %v355
    %vm357 = vcmask 130112
    %v358 = vsel %vm357, %v345, -inf
    %359 = vmax.xlane.f32.xlu0 %v358
    %v360 = vpop.xlane.xlu0 %359
    %v361 = vsub.f32 %v345, %v360
    %v362 = vmul.f32 %v361, 1.442695
    %v363 = vpow.pop %v362
    %365 = vrot.lane.b32.xlu0 %v363, 120
    %v366 = vpop.permute.xlu0 %365
    %v368 = vsel %vm198, %v366, 0.0
    %369 = vadd.xlane.f32.xlu0 %v368
    %v370 = vpop.xlane.xlu0 %369
    %v371 = vrcp.pop %v370
    %v372 = vmul.f32 %v363, %v371
    %374 = vrot.lane.b32.xlu0 %v372, 120
    %v375 = vpop.permute.xlu0 %374
    %vm377 = vcmask 1040384
    %v378 = vsel %vm377, %v356, %v375
    %vm379 = vcmask 58368
    %380 = vst.msk [vmem:[#allocation2] sm:$0x3] %vm379, %v378
    // Predicated region
    $region26: #{attention_forward.1} parent=1 // pred_check
      _
    $region27: #{attention_forward.1} parent=1 // pred_check_branch
      %382 = sbr.rel (0) target = $region29
    $region28: #{attention_forward.1} parent=1 // pred_region
      %s384 = ssub.s32 32, 32
      %385 = vsyncadd [#allocation3], %s384
      %s387 = sshll.u32 [#allocation2], 4
      %s388 = int_to_ptr.vmem [resolvable:$true] %s387
      %390 = dma.vmem_to_hbm [thread:$0]  %s388, 32, %s6, [#allocation3]
    $region29: #{attention_forward.1} parent=1 // pred_fallthru
      _
    // Predicated region
    $region30: #{attention_forward.1} parent=1 // pred_check
      _
    $region31: #{attention_forward.1} parent=1 // pred_check_branch
      %392 = sbr.rel (0) target = $region33
    $region32: #{attention_forward.1} parent=1 // pred_region
      %393 = dma.done [#allocation3], 32
    $region33: #{attention_forward.1} parent=1 // pred_fallthru
      _
    %394 = vsyncpa [#allocation3], 1

</llo_original>
